<compile_context>
chip_gen: v7x
topology: tpu7x:2x2x1
jax: 0.10.0
libtpu: 0.0.40
codegen_flags: <defaults>
</compile_context>

<pallas_src>
import math
import functools

import numpy as np
import jax
import jax.numpy as jnp
from jax.experimental import pallas as pl
from jax.experimental.pallas import tpu as pltpu


# ---------------------------------------------------------------------------
# helpers
# ---------------------------------------------------------------------------

_LANE = 128
_ROW_PACK = 16            # bf16 packs 16 rows / vreg -> keep row tiles multiples of 16
_DEFAULT_TM = 512         # 512-row tiles reach ~85% of HBM roofline on v6e
_MEGACORE_MIN_ROWS = 64   # above this, force >=2 grid blocks for the two v7x TCs


def _round_up(x, m):
    return ((x + m - 1) // m) * m


_VMEM_LIMIT_CACHE = None


def _vmem_limit_bytes():
    """64 MiB on 128-MiB-VMEM chips (v5e/v6e); <= 48 MiB on v7x (64 MiB / TC)."""
    global _VMEM_LIMIT_CACHE
    if _VMEM_LIMIT_CACHE is None:
        cap = 64 * 1024 * 1024
        try:
            cap = int(getattr(pltpu.get_tpu_info(), "vmem_capacity_bytes", cap))
        except Exception:
            pass
        _VMEM_LIMIT_CACHE = int(min(64 * 1024 * 1024, (cap * 3) // 4))
    return _VMEM_LIMIT_CACHE


def _row_tiling(n, tm):
    """Pick (row tile, padded row count).

    Rows are rounded to 16 (bf16 sublane packing).  When there is enough work,
    force at least two grid blocks so dimension_semantics=("parallel",) can
    shard the row axis across both v7x TensorCores.
    """
    n = max(int(n), 1)
    if n > _MEGACORE_MIN_ROWS:
        tm_eff = min(tm, _round_up((n + 1) // 2, _ROW_PACK))
    else:
        tm_eff = min(tm, _round_up(n, _ROW_PACK))
    n_pad = _round_up(n, tm_eff)
    return tm_eff, n_pad


def _pad_rows(x, n_pad):
    """Zero-pad the leading (row) axis only; no copy when already aligned."""
    n = x.shape[0]
    if n == n_pad:
        return x
    return jnp.zeros((n_pad,) + x.shape[1:], x.dtype).at[:n].set(x)


# ---------------------------------------------------------------------------
# Pallas kernels
# ---------------------------------------------------------------------------

def _obj_path_kernel(roi_ref, wco_ref, bco_ref, wobj_ref, bobj_ref,
                     refined_ref, label_ref, *, num_obj_cls):
    """hidden = relu(roi @ Wco + bco); refined = hidden @ Wobj + bobj;
    label = argmax(refined[:, 1:num_obj_cls])  (index into the sliced view,
    first occurrence on ties, like torch.max)."""
    # f32 -> bf16 cast in-kernel (VPU, hides under the MXU); features are read
    # from HBM exactly once in their native f32 layout.
    x = roi_ref[...].astype(wco_ref.dtype)
    h = jnp.dot(x, wco_ref[...], preferred_element_type=jnp.float32)
    h = jnp.maximum(h + bco_ref[...], 0.0)
    logits = jnp.dot(h.astype(wobj_ref.dtype), wobj_ref[...],
                     preferred_element_type=jnp.float32) + bobj_ref[...]
    refined_ref[...] = logits

    col = jax.lax.broadcasted_iota(jnp.int32, logits.shape, 1)
    valid = (col >= 1) & (col < num_obj_cls)          # skip background + padded cols
    masked = jnp.where(valid, logits, -jnp.inf)
    m = jnp.max(masked, axis=-1, keepdims=True)
    big = jnp.int32(logits.shape[-1])
    idx = jnp.min(jnp.where(masked == m, col, big), axis=-1, keepdims=True)
    # matches `refined_obj_logits[:, 1:].max(-1)[1]` (sliced-view index, as in
    # the reference forward); the (tm, 1) store is masked but tiny.
    label_ref[...] = idx - 1


def _rel_path_kernel(uf_ref, wcr_ref, bcr_ref, wrel_ref, brel_ref, bias_ref, o_ref):
    """hidden = relu(union @ Wcr + bcr);
    rel_logits = hidden @ Wrel + brel + freq_bias_rows (freq_lambda pre-folded)."""
    x = uf_ref[...].astype(wcr_ref.dtype)
    h = jnp.dot(x, wcr_ref[...], preferred_element_type=jnp.float32)
    h = jnp.maximum(h + bcr_ref[...], 0.0)
    logits = jnp.dot(h.astype(wrel_ref.dtype), wrel_ref[...],
                     preferred_element_type=jnp.float32)
    o_ref[...] = logits + brel_ref[...] + bias_ref[...]


# ---------------------------------------------------------------------------
# pallas_call wrappers (row-tiled, parallel grid, bf16 matmul operands)
# ---------------------------------------------------------------------------

def obj_path_forward(roi, wco, bco, wobj, bobj, num_obj_cls, tm=_DEFAULT_TM):
    n, d = roi.shape
    hp = wco.shape[1]
    cp = wobj.shape[1]
    tm_eff, n_pad = _row_tiling(n, tm)
    x = _pad_rows(roi, n_pad)          # f32, row-pad only (no external bf16 copy)

    refined, labels = pl.pallas_call(
        functools.partial(_obj_path_kernel, num_obj_cls=num_obj_cls),
        grid=(n_pad // tm_eff,),
        in_specs=[pl.BlockSpec((tm_eff, d), lambda i: (i, 0)),
                  pl.BlockSpec((d, hp), lambda i: (0, 0)),   # grid-invariant
                  pl.BlockSpec((1, hp), lambda i: (0, 0)),
                  pl.BlockSpec((hp, cp), lambda i: (0, 0)),
                  pl.BlockSpec((1, cp), lambda i: (0, 0))],
        out_specs=(pl.BlockSpec((tm_eff, cp), lambda i: (i, 0)),
                   pl.BlockSpec((tm_eff, 1), lambda i: (i, 0))),
        out_shape=(jax.ShapeDtypeStruct((n_pad, cp), jnp.float32),
                   jax.ShapeDtypeStruct((n_pad, 1), jnp.int32)),
        compiler_params=pltpu.CompilerParams(
            dimension_semantics=("parallel",),
            vmem_limit_bytes=_vmem_limit_bytes()),
    )(x, wco, bco, wobj, bobj)
    return refined[:n, :num_obj_cls], labels[:n, 0]


def rel_path_forward(union_feats, wcr, bcr, wrel, brel, freq_table, pair_idx,
                     num_rel_cls, tm=_DEFAULT_TM):
    n, d = union_feats.shape
    hp = wcr.shape[1]
    cp = wrel.shape[1]
    tm_eff, n_pad = _row_tiling(n, tm)
    x = _pad_rows(union_feats, n_pad)
    idx = _pad_rows(pair_idx.astype(jnp.int32), n_pad)
    # Single fused gather directly into the row-padded layout the kernel
    # streams in (no second pad/copy of the (Nrel, c_rel) f32 bias slab).
    bias = jnp.take(freq_table, idx, axis=0)

    out = pl.pallas_call(
        _rel_path_kernel,
        grid=(n_pad // tm_eff,),
        in_specs=[pl.BlockSpec((tm_eff, d), lambda i: (i, 0)),
                  pl.BlockSpec((d, hp), lambda i: (0, 0)),   # grid-invariant
                  pl.BlockSpec((1, hp), lambda i: (0, 0)),
                  pl.BlockSpec((hp, cp), lambda i: (0, 0)),
                  pl.BlockSpec((1, cp), lambda i: (0, 0)),
                  pl.BlockSpec((tm_eff, cp), lambda i: (i, 0))],
        out_specs=pl.BlockSpec((tm_eff, cp), lambda i: (i, 0)),
        out_shape=jax.ShapeDtypeStruct((n_pad, cp), jnp.float32),
        compiler_params=pltpu.CompilerParams(
            dimension_semantics=("parallel",),
            vmem_limit_bytes=_vmem_limit_bytes()),
    )(x, wcr, bcr, wrel, brel, bias)
    return out[:n, :num_rel_cls]


# ---------------------------------------------------------------------------
# Module
# ---------------------------------------------------------------------------

class BGNNPredictorPallas:
    """JAX/Pallas port of the BGNNPredictor forward pass (eval mode, sgcls)."""

    def __init__(self, key, in_channels, pooling_dim, hidden_dim,
                 num_obj_cls, num_rel_cls):
        self.num_obj_cls = num_obj_cls
        self.num_rel_cls = num_rel_cls

        # Only hidden / class dims are lane-padded (zero columns/rows are
        # mathematically inert); feature K dims stay exact so activations need
        # no column padding.
        d_hid = _round_up(hidden_dim, _LANE)
        c_obj = _round_up(num_obj_cls, _LANE)
        c_rel = _round_up(num_rel_cls, _LANE)

        k = jax.random.split(key, 9)

        def lin_init(kw, kb, fan_in, fan_out, fan_in_p, fan_out_p):
            bound = 1.0 / math.sqrt(fan_in)
            w = jax.random.uniform(kw, (fan_in, fan_out), jnp.float32, -bound, bound)
            b = jax.random.uniform(kb, (1, fan_out), jnp.float32, -bound, bound)
            wp = (jnp.zeros((fan_in_p, fan_out_p), jnp.bfloat16)
                      .at[:fan_in, :fan_out].set(w.astype(jnp.bfloat16)))
            bp = jnp.zeros((1, fan_out_p), jnp.float32).at[:, :fan_out].set(b)
            return wp, bp

        # TODO(synk): BGNNContext (iterative graph message passing / relatedness
        # estimation) has no provided source; approximated by a single
        # linear+ReLU projection per path producing obj_feats / rel_feats of
        # dim hidden_dim.
        self.Wco, self.bco = lin_init(k[0], k[1], in_channels, hidden_dim,
                                      in_channels, d_hid)
        self.Wcr, self.bcr = lin_init(k[2], k[3], pooling_dim, hidden_dim,
                                      pooling_dim, d_hid)
        # obj / rel classifiers
        self.Wobj, self.bobj = lin_init(k[4], k[5], hidden_dim, num_obj_cls,
                                        d_hid, c_obj)
        self.Wrel, self.brel = lin_init(k[6], k[7], hidden_dim, num_rel_cls,
                                        d_hid, c_rel)

        # FrequencyBias embedding table (num_obj_cls^2, num_rel_cls), synthetic
        # init; freq_lambda is a fixed non-trainable 1.0 => folded into it.
        freq_lambda = 1.0
        tbl = 0.1 * jax.random.normal(
            k[8], (num_obj_cls * num_obj_cls, num_rel_cls), jnp.float32)
        self.freq_table = (jnp.zeros((num_obj_cls * num_obj_cls, c_rel), jnp.float32)
                               .at[:, :num_rel_cls].set(freq_lambda * tbl))

    def __call__(self, predict_logits_list, rel_pair_idxs_list,
                 roi_features, union_features):
        num_objs = [int(p.shape[0]) for p in predict_logits_list]
        num_rels = [int(r.shape[0]) for r in rel_pair_idxs_list]
        assert len(num_rels) == len(num_objs)

        # ----- object path: context proj + obj classifier + sgcls argmax (fused)
        refined_obj_logits, obj_pred_labels = obj_path_forward(
            roi_features, self.Wco, self.bco, self.Wobj, self.bobj, self.num_obj_cls)

        # sgcls: obj_pred_logits stay equal to the proposals' predict_logits
        # (replace/add + NMS only happens in the sgdet branch).
        obj_pred_logits_splits = list(predict_logits_list)

        # ----- frequency bias indices: one fused gather of the pair labels.
        # NOTE: obj_pred_labels is the index into the logits[:, 1:] sliced view,
        # exactly as the reference forward computes it before index_with_labels.
        obj_offsets = np.concatenate([[0], np.cumsum(num_objs)[:-1]]).astype(np.int32)
        pairs_global = jnp.concatenate(
            [p.astype(jnp.int32) + jnp.int32(off)
             for p, off in zip(rel_pair_idxs_list, obj_offsets)], axis=0)  # (Nrel, 2)
        sub_lbl = obj_pred_labels[pairs_global[:, 0]]
        obj_lbl = obj_pred_labels[pairs_global[:, 1]]
        pair_idx = sub_lbl * self.num_obj_cls + obj_lbl                    # (Nrel,)

        # ----- relation path: context proj + rel classifier + bias add (fused)
        rel_cls_logits = rel_path_forward(
            union_features, self.Wcr, self.bcr, self.Wrel, self.brel,
            self.freq_table, pair_idx, self.num_rel_cls)

        # split per image with static Python split points
        rel_split_points = np.cumsum(num_rels)[:-1].tolist()
        rel_splits = list(jnp.split(rel_cls_logits, rel_split_points, axis=0))

        add_losses = {}       # training-only pre_cls_logits / RelAwareLoss skipped
        self._last_refined_obj_logits = refined_obj_logits
        self._last_obj_pred_labels = obj_pred_labels

        return obj_pred_logits_splits, rel_splits, add_losses, None, None


# ---------------------------------------------------------------------------
# Demo
# ---------------------------------------------------------------------------

if __name__ == "__main__":
    key = jax.random.PRNGKey(0)
    num_objs = [8, 8]
    num_rels = [8, 8]
    in_channels = 64
    pooling_dim = 64
    hidden_dim = 32
    num_obj_cls = 16
    num_rel_cls = 8

    ks = jax.random.split(key, 8)
    predict_logits_list = [
        jax.random.normal(ks[0], (num_objs[0], num_obj_cls), jnp.float32),
        jax.random.normal(ks[1], (num_objs[1], num_obj_cls), jnp.float32),
    ]
    rel_pair_idxs_list = [
        jax.random.randint(ks[2], (num_rels[0], 2), 0, num_objs[0], jnp.int32),
        jax.random.randint(ks[3], (num_rels[1], 2), 0, num_objs[1], jnp.int32),
    ]
    roi_features = jax.random.normal(ks[4], (sum(num_objs), in_channels), jnp.float32)
    union_features = jax.random.normal(ks[5], (sum(num_rels), pooling_dim), jnp.float32)

    model = BGNNPredictorPallas(ks[6], in_channels, pooling_dim, hidden_dim,
                                num_obj_cls, num_rel_cls)
    obj_logits, rel_logits, add_losses, pseudo, one_hot = model(
        predict_logits_list, rel_pair_idxs_list, roi_features, union_features)

    for t in list(obj_logits) + list(rel_logits):
        jax.block_until_ready(t)
    jax.block_until_ready(model._last_refined_obj_logits)
    jax.block_until_ready(model._last_obj_pred_labels)
    print("KERNEL_OK")
</pallas_src>

<mosaic_0001>
module attributes {stable_mosaic.version = 11 : i64} {
  func.func @_obj_path_kernel(%arg0: i32, %arg1: memref<16x64xf32, #tpu.memory_space<vmem>>, %arg2: memref<64x128xbf16, #tpu.memory_space<vmem>>, %arg3: memref<1x128xf32, #tpu.memory_space<vmem>>, %arg4: memref<128x128xbf16, #tpu.memory_space<vmem>>, %arg5: memref<1x128xf32, #tpu.memory_space<vmem>>, %arg6: memref<16x128xf32, #tpu.memory_space<vmem>>, %arg7: memref<16x1xi32, #tpu.memory_space<vmem>>) attributes {dimension_semantics = [#tpu.dimension_semantics<parallel>], iteration_bounds = array<i64: 1>, scalar_prefetch = 0 : i64, scratch_operands = 0 : i64, tpu.core_type = #tpu.core_type<tc>, window_params = [{transform_indices = @transform_0, window_bounds = array<i64: 16, 64>}, {pipeline_mode = #tpu.pipeline_mode<synchronous>, transform_indices = @transform_1, window_bounds = array<i64: 64, 128>}, {pipeline_mode = #tpu.pipeline_mode<synchronous>, transform_indices = @transform_2, window_bounds = array<i64: 1, 128>}, {pipeline_mode = #tpu.pipeline_mode<synchronous>, transform_indices = @transform_3, window_bounds = array<i64: 128, 128>}, {pipeline_mode = #tpu.pipeline_mode<synchronous>, transform_indices = @transform_4, window_bounds = array<i64: 1, 128>}, {transform_indices = @transform_5, window_bounds = array<i64: 16, 128>}, {transform_indices = @transform_6, window_bounds = array<i64: 16, 1>}]} {
    %c0 = arith.constant 0 : index
    %c0_0 = arith.constant 0 : index
    %0 = vector.load %arg1[%c0, %c0_0] : memref<16x64xf32, #tpu.memory_space<vmem>>, vector<16x64xf32>
    %1 = arith.truncf %0 : vector<16x64xf32> to vector<16x64xbf16>
    %c0_1 = arith.constant 0 : index
    %c0_2 = arith.constant 0 : index
    %2 = vector.load %arg2[%c0_1, %c0_2] : memref<64x128xbf16, #tpu.memory_space<vmem>>, vector<64x128xbf16>
    %cst = arith.constant dense<0.000000e+00> : vector<16x128xf32>
    %3 = tpu.matmul %1, %2, %cst {dimension_numbers = #tpu.dot_dimension_numbers<[1], [0], [0], [1], [0, 0, 1, 1], [], []>} : vector<16x64xbf16>, vector<64x128xbf16>, vector<16x128xf32> -> vector<16x128xf32>
    %c0_3 = arith.constant 0 : index
    %c0_4 = arith.constant 0 : index
    %4 = vector.load %arg3[%c0_3, %c0_4] : memref<1x128xf32, #tpu.memory_space<vmem>>, vector<1x128xf32>
    %5 = vector.broadcast %4 : vector<1x128xf32> to vector<16x128xf32>
    %6 = arith.addf %3, %5 : vector<16x128xf32>
    %cst_5 = arith.constant 0.000000e+00 : f32
    %7 = vector.broadcast %cst_5 : f32 to vector<16x128xf32>
    %8 = arith.maximumf %6, %7 : vector<16x128xf32>
    %9 = arith.truncf %8 : vector<16x128xf32> to vector<16x128xbf16>
    %c0_6 = arith.constant 0 : index
    %c0_7 = arith.constant 0 : index
    %10 = vector.load %arg4[%c0_6, %c0_7] : memref<128x128xbf16, #tpu.memory_space<vmem>>, vector<128x128xbf16>
    %cst_8 = arith.constant dense<0.000000e+00> : vector<16x128xf32>
    %11 = tpu.matmul %9, %10, %cst_8 {dimension_numbers = #tpu.dot_dimension_numbers<[1], [0], [0], [1], [0, 0, 1, 1], [], []>} : vector<16x128xbf16>, vector<128x128xbf16>, vector<16x128xf32> -> vector<16x128xf32>
    %c0_9 = arith.constant 0 : index
    %c0_10 = arith.constant 0 : index
    %12 = vector.load %arg5[%c0_9, %c0_10] : memref<1x128xf32, #tpu.memory_space<vmem>>, vector<1x128xf32>
    %13 = vector.broadcast %12 : vector<1x128xf32> to vector<16x128xf32>
    %14 = arith.addf %11, %13 : vector<16x128xf32>
    %c0_11 = arith.constant 0 : index
    %c0_12 = arith.constant 0 : index
    %15 = vector.load %arg6[%c0_11, %c0_12] : memref<16x128xf32, #tpu.memory_space<vmem>>, vector<16x128xf32>
    tpu.vector_store %arg6[%c0_11, %c0_12], %14 {strides = array<i32>} : memref<16x128xf32, #tpu.memory_space<vmem>>, vector<16x128xf32>,
    %16 = tpu.iota {dimensions = array<i32: 1>} : vector<16x128xi32>
    %c1_i32 = arith.constant 1 : i32
    %17 = vector.broadcast %c1_i32 : i32 to vector<16x128xi32>
    %18 = arith.cmpi sge, %16, %17 : vector<16x128xi32>
    %c16_i32 = arith.constant 16 : i32
    %19 = vector.broadcast %c16_i32 : i32 to vector<16x128xi32>
    %20 = arith.cmpi slt, %16, %19 : vector<16x128xi32>
    %21 = arith.andi %18, %20 : vector<16x128xi1>
    %cst_13 = arith.constant 0xFF800000 : f32
    %22 = vector.broadcast %cst_13 : f32 to vector<16x128xf32>
    %23 = arith.select %21, %14, %22 : vector<16x128xi1>, vector<16x128xf32>
    %cst_14 = arith.constant dense<0xFF800000> : vector<16xf32>
    %24 = vector.multi_reduction <maximumf>, %23, %cst_14 [1] : vector<16x128xf32> to vector<16xf32>
    %25 = vector.shape_cast %24 : vector<16xf32> to vector<16x1xf32>
    %26 = vector.broadcast %25 : vector<16x1xf32> to vector<16x128xf32>
    %27 = arith.cmpf oeq, %23, %26 : vector<16x128xf32>
    %c128_i32 = arith.constant 128 : i32
    %28 = vector.broadcast %c128_i32 : i32 to vector<16x128xi32>
    %29 = arith.select %27, %16, %28 : vector<16x128xi1>, vector<16x128xi32>
    %cst_15 = arith.constant dense<2147483647> : vector<16xi32>
    %30 = vector.multi_reduction <minsi>, %29, %cst_15 [1] : vector<16x128xi32> to vector<16xi32>
    %31 = vector.shape_cast %30 : vector<16xi32> to vector<16x1xi32>
    %c1_i32_16 = arith.constant 1 : i32
    %32 = vector.broadcast %c1_i32_16 : i32 to vector<16x1xi32>
    %33 = arith.subi %31, %32 : vector<16x1xi32>
    %c0_17 = arith.constant 0 : index
    %c0_18 = arith.constant 0 : index
    %34 = vector.load %arg7[%c0_17, %c0_18] : memref<16x1xi32, #tpu.memory_space<vmem>>, vector<16x1xi32>
    tpu.vector_store %arg7[%c0_17, %c0_18], %33 {strides = array<i32>} : memref<16x1xi32, #tpu.memory_space<vmem>>, vector<16x1xi32>,
    return
  }
  func.func @transform_0(%arg0: i32) -> (i32, i32) {
    %c0_i32 = arith.constant 0 : i32
    %c0_i32_0 = arith.constant 0 : i32
    return %arg0, %c0_i32 : i32, i32
  }
  func.func @transform_1(%arg0: i32) -> (i32, i32) {
    %c0_i32 = arith.constant 0 : i32
    %c0_i32_0 = arith.constant 0 : i32
    %c0_i32_1 = arith.constant 0 : i32
    return %c0_i32, %c0_i32_0 : i32, i32
  }
  func.func @transform_2(%arg0: i32) -> (i32, i32) {
    %c0_i32 = arith.constant 0 : i32
    %c0_i32_0 = arith.constant 0 : i32
    %c0_i32_1 = arith.constant 0 : i32
    return %c0_i32, %c0_i32_0 : i32, i32
  }
  func.func @transform_3(%arg0: i32) -> (i32, i32) {
    %c0_i32 = arith.constant 0 : i32
    %c0_i32_0 = arith.constant 0 : i32
    %c0_i32_1 = arith.constant 0 : i32
    return %c0_i32, %c0_i32_0 : i32, i32
  }
  func.func @transform_4(%arg0: i32) -> (i32, i32) {
    %c0_i32 = arith.constant 0 : i32
    %c0_i32_0 = arith.constant 0 : i32
    %c0_i32_1 = arith.constant 0 : i32
    return %c0_i32, %c0_i32_0 : i32, i32
  }
  func.func @transform_5(%arg0: i32) -> (i32, i32) {
    %c0_i32 = arith.constant 0 : i32
    %c0_i32_0 = arith.constant 0 : i32
    return %arg0, %c0_i32 : i32, i32
  }
  func.func @transform_6(%arg0: i32) -> (i32, i32) {
    %c0_i32 = arith.constant 0 : i32
    %c0_i32_0 = arith.constant 0 : i32
    return %arg0, %c0_i32 : i32, i32
  }
}

</mosaic_0001>

<llo_original>
// kernel: tpu_custom_call.1
$region0: #{tpu_custom_call.1}
  #allocation0 [shape = 'u32[]', space=smem, size = 0x4, offset = 0x4, fixed_abs, tag = 'smem constant byte address 0x4 - core index']
  #allocation1 [shape = 'u32[144,128]{1,0:T(1,128)}', space=vmem, size = 0x12000, scoped, tag = 'internal scratch']
  %s0 = inlined_call_operand.hbm [shape: f32[16,64], index: 0, kind: input, shape index: {}]
  %s1 = inlined_call_operand.hbm [shape: bf16[64,128], index: 1, kind: input, shape index: {}]
  %s2 = inlined_call_operand.vmem [shape: f32[1,128], index: 2, kind: input, shape index: {}]
  %s3 = inlined_call_operand.hbm [shape: bf16[128,128], index: 3, kind: input, shape index: {}]
  %s4 = inlined_call_operand.vmem [shape: f32[1,128], index: 4, kind: input, shape index: {}]
  %s5 = inlined_call_operand.hbm [shape: f32[16,128], index: 5, kind: output, shape index: {0}]
  %s6 = inlined_call_operand.vmem [shape: s32[16,1], index: 6, kind: output, shape index: {1}]
  %7 = xla_tuple %s5, %s6
  %s8 = sld [smem:[#allocation0]]
  $region50: #{tpu_custom_call.1} parent=0
    _
  %s10 = ssub.s32 1, %s8
  %s11 = scalar_select 0, %s10, %s8
  $region1: #{tpu_custom_call.1} parent=0
    #allocation2 [shape = 'u8[8192]{0}', space=vmem, size = 0x2000, scoped, tag = 'input window, operand 0, single buffered']
    #allocation3 [shape = 's32[1]{0}', space=sflag, size = 0x4, scoped, tag = 'scoped memory for tpu_custom_call.1']
    #allocation4 [shape = 's32[1]{0}', space=sflag, size = 0x4, scoped, tag = 'scoped memory for tpu_custom_call.1']
    #allocation5 [shape = 'u8[16384]{0}', space=vmem, size = 0x4000, scoped, tag = 'input window, operand 1, single buffered']
    #allocation6 [shape = 's32[1]{0}', space=sflag, size = 0x4, scoped, tag = 'scoped memory for tpu_custom_call.1']
    #allocation7 [shape = 'u8[32768]{0}', space=vmem, size = 0x8000, scoped, tag = 'input window, operand 3, single buffered']
    #allocation8 [shape = 'u8[8192]{0}', space=vmem, size = 0x2000, scoped, tag = 'output window, operand 0, single buffered']
    %12 = vsyncpa [#allocation3], 0
    %13 = vsyncpa [#allocation6], 0
    %14 = vsyncpa [#allocation4], 0
    // Predicated region
    $region2: #{tpu_custom_call.1} parent=1 // pred_check
      _
    $region3: #{tpu_custom_call.1} parent=1 // pred_check_branch
      %16 = sbr.rel (0) target = $region5
    $region4: #{tpu_custom_call.1} parent=1 // pred_region
      %s18 = ssub.s32 256, 256
      %19 = vsyncadd [#allocation3], %s18
      %s20 = sshll.u32 [#allocation2], 4
      %s21 = int_to_ptr.vmem [resolvable:$true] %s20
      %26 = dma.hbm_to_vmem [thread:$0]  %s0, 256, %s21, [#allocation3], 128, 128, 8
    $region5: #{tpu_custom_call.1} parent=1 // pred_fallthru
      _
    // Predicated region
    $region6: #{tpu_custom_call.1} parent=1 // pred_check
      _
    $region7: #{tpu_custom_call.1} parent=1 // pred_check_branch
      %28 = sbr.rel (0) target = $region9
    $region8: #{tpu_custom_call.1} parent=1 // pred_region
      %s30 = ssub.s32 512, 512
      %31 = vsyncadd [#allocation6], %s30
      %s32 = sshll.u32 [#allocation5], 4
      %s33 = int_to_ptr.vmem [resolvable:$true] %s32
      %38 = dma.hbm_to_vmem [thread:$0]  %s1, 512, %s33, [#allocation6], 64, 64, 4
    $region9: #{tpu_custom_call.1} parent=1 // pred_fallthru
      _
    // Predicated region
    $region10: #{tpu_custom_call.1} parent=1 // pred_check
      _
    $region11: #{tpu_custom_call.1} parent=1 // pred_check_branch
      %40 = sbr.rel (0) target = $region13
    $region12: #{tpu_custom_call.1} parent=1 // pred_region
      _
    $region13: #{tpu_custom_call.1} parent=1 // pred_fallthru
      _
    // Predicated region
    $region14: #{tpu_custom_call.1} parent=1 // pred_check
      _
    $region15: #{tpu_custom_call.1} parent=1 // pred_check_branch
      %42 = sbr.rel (0) target = $region17
    $region16: #{tpu_custom_call.1} parent=1 // pred_region
      %s44 = ssub.s32 1024, 1024
      %45 = vsyncadd [#allocation6], %s44
      %s46 = sshll.u32 [#allocation7], 4
      %s47 = int_to_ptr.vmem [resolvable:$true] %s46
      %52 = dma.hbm_to_vmem [thread:$0]  %s3, 1024, %s47, [#allocation6], 64, 64, 4
    $region17: #{tpu_custom_call.1} parent=1 // pred_fallthru
      _
    // Predicated region
    $region18: #{tpu_custom_call.1} parent=1 // pred_check
      _
    $region19: #{tpu_custom_call.1} parent=1 // pred_check_branch
      %54 = sbr.rel (0) target = $region21
    $region20: #{tpu_custom_call.1} parent=1 // pred_region
      _
    $region21: #{tpu_custom_call.1} parent=1 // pred_fallthru
      _
    // Predicated region
    $region22: #{tpu_custom_call.1} parent=1 // pred_check
      _
    $region23: #{tpu_custom_call.1} parent=1 // pred_check_branch
      %56 = sbr.rel (0) target = $region25
    $region24: #{tpu_custom_call.1} parent=1 // pred_region
      %57 = dma.done [#allocation3], 256
    $region25: #{tpu_custom_call.1} parent=1 // pred_fallthru
      _
    // Predicated region
    $region26: #{tpu_custom_call.1} parent=1 // pred_check
      _
    $region27: #{tpu_custom_call.1} parent=1 // pred_check_branch
      %59 = sbr.rel (0) target = $region29
    $region28: #{tpu_custom_call.1} parent=1 // pred_region
      %60 = dma.done [#allocation6], 512
    $region29: #{tpu_custom_call.1} parent=1 // pred_fallthru
      _
    // Predicated region
    $region30: #{tpu_custom_call.1} parent=1 // pred_check
      _
    $region31: #{tpu_custom_call.1} parent=1 // pred_check_branch
      %62 = sbr.rel (0) target = $region33
    $region32: #{tpu_custom_call.1} parent=1 // pred_region
      %63 = dma.done [#allocation6], 1024
    $region33: #{tpu_custom_call.1} parent=1 // pred_fallthru
      _
    %v65 = vld [vmem:[#allocation2] sm:$0xff]
    %v66 = vld [vmem:[#allocation2 + $0x8] sm:$0xff]
    %v67 = vpack.c.bf16 %v66, %v65
    %v68 = vld [vmem:[#allocation5] sm:$0xf]
    %v69 = vld [vmem:[#allocation5 + $0x4] sm:$0xf]
    %v70 = vld [vmem:[#allocation5 + $0x8] sm:$0xf]
    %v71 = vld [vmem:[#allocation5 + $0xc] sm:$0xf]
    %v72 = vld [vmem:[#allocation5 + $0x10] sm:$0xf]
    %v73 = vld [vmem:[#allocation5 + $0x14] sm:$0xf]
    %v74 = vld [vmem:[#allocation5 + $0x18] sm:$0xf]
    %v75 = vld [vmem:[#allocation5 + $0x1c] sm:$0xf]
    %v76 = vld [vmem:[%s2] sm:$0x1]
    %v78 = vlaneseq
    %v79 = vshrl.u32 %v78, 7
    %v80 = vsub.s32 0, %v79
    %v81 = vrot.slane %v76, %v80
    %v91 = vunpack.c.l.b16 %v68
    %v92 = vunpack.c.l.b16 %v69
    %v93 = vunpack.c.l.b16 %v70
    %v94 = vunpack.c.l.b16 %v71
    %v95 = vunpack.c.l.b16 %v72
    %v96 = vunpack.c.l.b16 %v73
    %v97 = vunpack.c.l.b16 %v74
    %v98 = vunpack.c.l.b16 %v75
    %v99 = vpack.c.b16 %v92, %v91
    %v100 = vpack.c.b16 %v94, %v93
    %v101 = vpack.c.b16 %v96, %v95
    %v102 = vpack.c.b16 %v98, %v97
    %vm107 = vcmask 523264
    %v109 = vsel %vm107, %v67, 0
    %111 = vmatprep.subr.bf16.mxu0 0
    %112 = vmatpush1.bf16.msra.mxu0 %v99
    %113 = vmatprep.subr.bf16.mxu0 0
    %114 = vmatpush1.bf16.msra.mxu0 %v100
    %115 = vmatprep.subr.bf16.mxu0 0
    %116 = vmatpush1.bf16.msra.mxu0 %v101
    %117 = vmatprep.subr.bf16.mxu0 0
    %118 = vmatpush1.bf16.msra.mxu0 %v102
    %119 = vmatprep.subr.bf16.mxu0 0
    %120 = vmatpush1.bf16.msra.mxu0 0
    %121 = vmatprep.subr.bf16.mxu0 0
    %122 = vmatpush1.bf16.msra.mxu0 0
    %123 = vmatprep.subr.bf16.mxu0 0
    %124 = vmatpush1.bf16.msra.mxu0 0
    %125 = vmatprep.subr.bf16.mxu0 0
    %126 = vmatpush1.bf16.msra.mxu0 0
    %127 = vmatprep.subr.bf16.mxu0 0
    %128 = vmatpush1.bf16.msra.mxu0 0
    %129 = vmatprep.subr.bf16.mxu0 0
    %130 = vmatpush1.bf16.msra.mxu0 0
    %131 = vmatprep.subr.bf16.mxu0 0
    %132 = vmatpush1.bf16.msra.mxu0 0
    %133 = vmatprep.subr.bf16.mxu0 0
    %134 = vmatpush1.bf16.msra.mxu0 0
    %135 = vmatprep.subr.bf16.mxu0 0
    %136 = vmatpush1.bf16.msra.mxu0 0
    %137 = vmatprep.subr.bf16.mxu0 0
    %138 = vmatpush1.bf16.msra.mxu0 0
    %139 = vmatprep.subr.bf16.mxu0 0
    %140 = vmatpush1.bf16.msra.mxu0 0
    %141 = vmatprep.subr.bf16.mxu0 0
    %142 = vmatpush1.bf16.msra.mxu0 0
    %143 = vmatprep.mubr.bf16.mxu0 0
    %144 = vmatmul.mubr.bf16.gmra.mrb[0].mxu0 %v109
    %v145 = vpop.f32.mrb[0].mxu0
    %v146 = vadd.f32 %v81, %v145
    %v147 = vpop.f32.mrb[0].mxu0
    %v148 = vpop.f32.mrb[0].mxu0
    %v149 = vadd.f32 %v81, %v148
    %v150 = vpop.f32.mrb[0].mxu0
    %151 = vdwg.mxu0
    %v152 = vmax.f32 %v146, 0.0
    %v153 = vmax.f32 %v149, 0.0
    %v154 = vpack.c.bf16 %v153, %v152
    %v155 = vld [vmem:[#allocation7] sm:$0xf]
    %v156 = vld [vmem:[#allocation7 + $0x4] sm:$0xf]
    %v157 = vld [vmem:[#allocation7 + $0x8] sm:$0xf]
    %v158 = vld [vmem:[#allocation7 + $0xc] sm:$0xf]
    %v159 = vld [vmem:[#allocation7 + $0x10] sm:$0xf]
    %v160 = vld [vmem:[#allocation7 + $0x14] sm:$0xf]
    %v161 = vld [vmem:[#allocation7 + $0x18] sm:$0xf]
    %v162 = vld [vmem:[#allocation7 + $0x1c] sm:$0xf]
    %v163 = vld [vmem:[#allocation7 + $0x20] sm:$0xf]
    %v164 = vld [vmem:[#allocation7 + $0x24] sm:$0xf]
    %v165 = vld [vmem:[#allocation7 + $0x28] sm:$0xf]
    %v166 = vld [vmem:[#allocation7 + $0x2c] sm:$0xf]
    %v167 = vld [vmem:[#allocation7 + $0x30] sm:$0xf]
    %v168 = vld [vmem:[#allocation7 + $0x34] sm:$0xf]
    %v169 = vld [vmem:[#allocation7 + $0x38] sm:$0xf]
    %v170 = vld [vmem:[#allocation7 + $0x3c] sm:$0xf]
    %v171 = vld [vmem:[%s4] sm:$0x1]
    %v173 = vlaneseq
    %v174 = vshrl.u32 %v173, 7
    %v175 = vsub.s32 0, %v174
    %v176 = vrot.slane %v171, %v175
    %v194 = vunpack.c.l.b16 %v155
    %v195 = vunpack.c.l.b16 %v156
    %v196 = vunpack.c.l.b16 %v157
    %v197 = vunpack.c.l.b16 %v158
    %v198 = vunpack.c.l.b16 %v159
    %v199 = vunpack.c.l.b16 %v160
    %v200 = vunpack.c.l.b16 %v161
    %v201 = vunpack.c.l.b16 %v162
    %v202 = vunpack.c.l.b16 %v163
    %v203 = vunpack.c.l.b16 %v164
    %v204 = vunpack.c.l.b16 %v165
    %v205 = vunpack.c.l.b16 %v166
    %v206 = vunpack.c.l.b16 %v167
    %v207 = vunpack.c.l.b16 %v168
    %v208 = vunpack.c.l.b16 %v169
    %v209 = vunpack.c.l.b16 %v170
    %v210 = vpack.c.b16 %v195, %v194
    %v211 = vpack.c.b16 %v197, %v196
    %v212 = vpack.c.b16 %v199, %v198
    %v213 = vpack.c.b16 %v201, %v200
    %v214 = vpack.c.b16 %v203, %v202
    %v215 = vpack.c.b16 %v205, %v204
    %v216 = vpack.c.b16 %v207, %v206
    %v217 = vpack.c.b16 %v209, %v208
    %226 = vmatprep.subr.bf16.mxu0 0
    %227 = vmatpush1.bf16.msra.mxu0 %v210
    %228 = vmatprep.subr.bf16.mxu0 0
    %229 = vmatpush1.bf16.msra.mxu0 %v211
    %230 = vmatprep.subr.bf16.mxu0 0
    %231 = vmatpush1.bf16.msra.mxu0 %v212
    %232 = vmatprep.subr.bf16.mxu0 0
    %233 = vmatpush1.bf16.msra.mxu0 %v213
    %234 = vmatprep.subr.bf16.mxu0 0
    %235 = vmatpush1.bf16.msra.mxu0 %v214
    %236 = vmatprep.subr.bf16.mxu0 0
    %237 = vmatpush1.bf16.msra.mxu0 %v215
    %238 = vmatprep.subr.bf16.mxu0 0
    %239 = vmatpush1.bf16.msra.mxu0 %v216
    %240 = vmatprep.subr.bf16.mxu0 0
    %241 = vmatpush1.bf16.msra.mxu0 %v217
    %242 = vmatprep.subr.bf16.mxu0 0
    %243 = vmatpush1.bf16.msra.mxu0 0
    %244 = vmatprep.subr.bf16.mxu0 0
    %245 = vmatpush1.bf16.msra.mxu0 0
    %246 = vmatprep.subr.bf16.mxu0 0
    %247 = vmatpush1.bf16.msra.mxu0 0
    %248 = vmatprep.subr.bf16.mxu0 0
    %249 = vmatpush1.bf16.msra.mxu0 0
    %250 = vmatprep.subr.bf16.mxu0 0
    %251 = vmatpush1.bf16.msra.mxu0 0
    %252 = vmatprep.subr.bf16.mxu0 0
    %253 = vmatpush1.bf16.msra.mxu0 0
    %254 = vmatprep.subr.bf16.mxu0 0
    %255 = vmatpush1.bf16.msra.mxu0 0
    %256 = vmatprep.subr.bf16.mxu0 0
    %257 = vmatpush1.bf16.msra.mxu0 0
    %258 = vmatprep.mubr.bf16.mxu0 0
    %259 = vmatmul.mubr.bf16.gmra.mrb[0].mxu0 %v154
    %v260 = vpop.f32.mrb[0].mxu0
    %v261 = vadd.f32 %v176, %v260
    %v262 = vpop.f32.mrb[0].mxu0
    %v263 = vpop.f32.mrb[0].mxu0
    %v264 = vadd.f32 %v176, %v263
    %v265 = vpop.f32.mrb[0].mxu0
    %266 = vdwg.mxu0
    %267 = vst [vmem:[#allocation8] sm:$0xff] %v261
    %268 = vst [vmem:[#allocation8 + $0x8] sm:$0xff] %v264
    %v269 = vlaneseq
    %v270 = vand.u32 %v269, 127
    %vm271 = vcmp.ge.s32.totalorder %v270, 1
    %vm272 = vcmp.lt.s32.totalorder %v270, 16
    %vm273 = vmand %vm271, %vm272
    %v274 = vsel %vm273, %v261, -inf
    %v275 = vsel %vm273, %v264, -inf
    %276 = vmax.xlane.f32.xlu0 %v274
    %v277 = vpop.xlane.xlu0 %276
    %278 = vmax.xlane.f32.xlu0 %v275
    %v279 = vpop.xlane.xlu0 %278
    %vm280 = vcmp.eq.f32.partialorder %v274, %v277
    %vm281 = vcmp.eq.f32.partialorder %v275, %v279
    %v282 = vsel %vm280, %v270, 128
    %v283 = vsel %vm281, %v270, 128
    %v284 = vand.u32 %v282, 65535
    %v285 = vshra.s32 %v282, 16
    %v286 = vcvt.s32.f32 %v284
    %v287 = vcvt.s32.f32 %v285
    %288 = vmin.xlane.f32.xlu0 %v287
    %v289 = vpop.xlane.xlu0 %288
    %vm290 = vcmp.eq.f32.partialorder %v287, %v289
    %v291 = vsel %vm290, %v286, inf
    %292 = vmin.xlane.f32.xlu0 %v291
    %v293 = vpop.xlane.xlu0 %292
    %v294 = vcvt.f32.s32 %v293
    %v295 = vcvt.f32.s32 %v289
    %v296 = vshll.u32 %v295, 16
    %v297 = vadd.s32 %v296, %v294
    %v298 = vand.u32 %v283, 65535
    %v299 = vshra.s32 %v283, 16
    %v300 = vcvt.s32.f32 %v298
    %v301 = vcvt.s32.f32 %v299
    %302 = vmin.xlane.f32.xlu0 %v301
    %v303 = vpop.xlane.xlu0 %302
    %vm304 = vcmp.eq.f32.partialorder %v301, %v303
    %v305 = vsel %vm304, %v300, inf
    %306 = vmin.xlane.f32.xlu0 %v305
    %v307 = vpop.xlane.xlu0 %306
    %v308 = vcvt.f32.s32 %v307
    %v309 = vcvt.f32.s32 %v303
    %v310 = vshll.u32 %v309, 16
    %v311 = vadd.s32 %v310, %v308
    %v312 = vsub.s32 %v297, 1
    %v313 = vsub.s32 %v311, 1
    %vm314 = vcmask 7168
    %315 = vst.msk [vmem:[%s6] sm:$0xff] %vm314, %v312
    %316 = vst.msk [vmem:[%s6 + $0x8] sm:$0xff] %vm314, %v313
    // Predicated region
    $region34: #{tpu_custom_call.1} parent=1 // pred_check
      _
    $region35: #{tpu_custom_call.1} parent=1 // pred_check_branch
      %318 = sbr.rel (0) target = $region37
    $region36: #{tpu_custom_call.1} parent=1 // pred_region
      %s320 = ssub.s32 256, 256
      %321 = vsyncadd [#allocation4], %s320
      %s322 = sshll.u32 [#allocation8], 4
      %s323 = int_to_ptr.vmem [resolvable:$true] %s322
      %328 = dma.vmem_to_hbm [thread:$0]  %s323, 256, %s5, [#allocation4], 128, 128, 8
    $region37: #{tpu_custom_call.1} parent=1 // pred_fallthru
      _
    // Predicated region
    $region38: #{tpu_custom_call.1} parent=1 // pred_check
      _
    $region39: #{tpu_custom_call.1} parent=1 // pred_check_branch
      %330 = sbr.rel (0) target = $region41
    $region40: #{tpu_custom_call.1} parent=1 // pred_region
      _
    $region41: #{tpu_custom_call.1} parent=1 // pred_fallthru
      _
    // Predicated region
    $region42: #{tpu_custom_call.1} parent=1 // pred_check
      _
    $region43: #{tpu_custom_call.1} parent=1 // pred_check_branch
      %332 = sbr.rel (0) target = $region45
    $region44: #{tpu_custom_call.1} parent=1 // pred_region
      %333 = dma.done [#allocation4], 256
    $region45: #{tpu_custom_call.1} parent=1 // pred_fallthru
      _
    // Predicated region
    $region46: #{tpu_custom_call.1} parent=1 // pred_check
      _
    $region47: #{tpu_custom_call.1} parent=1 // pred_check_branch
      %335 = sbr.rel (0) target = $region49
    $region48: #{tpu_custom_call.1} parent=1 // pred_region
      _
    $region49: #{tpu_custom_call.1} parent=1 // pred_fallthru
      _
    %336 = vsyncpa [#allocation3], 1
    %337 = vsyncpa [#allocation6], 1
    %338 = vsyncpa [#allocation4], 1

</llo_original>
